<compile_context>
chip_gen: v7x
topology: tpu7x:2x2x1
jax: 0.10.0
libtpu: 0.0.40
codegen_flags: <defaults>
</compile_context>

<pallas_src>
import math
from functools import partial

import numpy as np
import jax
import jax.numpy as jnp
from jax.experimental import pallas as pl
from jax.experimental.pallas import tpu as pltpu


# ----------------------------------------------------------------------------
# Pallas kernel: per-pixel matmul (1x1 conv) on a (B, Cin, S) layout.
# ----------------------------------------------------------------------------
def _conv1x1_kernel(x_ref, w_ref, y_ref):
    """x_ref: (1, Cin, TS), w_ref: (Cout_total, Cin), y_ref: (1, Cout_total, TS)."""
    x = x_ref[0, :, :]                       # (Cin, TS)   -- lanes dense
    w = w_ref[...]                           # (Cout_total, Cin)
    y = jnp.dot(w, x, preferred_element_type=jnp.float32)   # (Cout_total, TS)
    y_ref[0, :, :] = y.astype(y_ref.dtype)


def _round_up(n, m):
    return ((n + m - 1) // m) * m


def _choose_tile_s(S, B, cap=8192):
    """Lane tile: multiple of 128, large enough to amortize per-step overhead,
    small enough to keep a few grid steps for pipelining / both v7x cores."""
    ts = min(_round_up(S, 128), cap)
    while ts > 512 and B * pl.cdiv(S, ts) < 8:
        ts = _round_up(ts // 2, 128)
    return max(ts, 128)


def conv1x1_flat(x_flat, w, *, tile_s):
    """x_flat: (B, Cin, S), w: (Cout_total, Cin) -> (B, Cout_total, S)."""
    B, Cin, S = x_flat.shape
    Cout = w.shape[0]
    grid = (B, pl.cdiv(S, tile_s))

    return pl.pallas_call(
        _conv1x1_kernel,
        out_shape=jax.ShapeDtypeStruct((B, Cout, S), x_flat.dtype),
        grid_spec=pltpu.PrefetchScalarGridSpec(
            num_scalar_prefetch=0,
            grid=grid,
            in_specs=[
                pl.BlockSpec((1, Cin, tile_s), lambda b, s: (b, 0, s)),   # x tile
                pl.BlockSpec((Cout, Cin), lambda b, s: (0, 0)),           # weights (full)
            ],
            out_specs=pl.BlockSpec((1, Cout, tile_s), lambda b, s: (b, 0, s)),
        ),
        compiler_params=pltpu.CompilerParams(
            dimension_semantics=("parallel", "parallel")),
    )(x_flat, w)


# ----------------------------------------------------------------------------
# Pixel shuffle (einops rearrange equivalent) — pure layout op, done in XLA.
# ----------------------------------------------------------------------------
def _pixel_shuffle(y, c_out, factor):
    """y: (B, c_out*prod(factor), *spatial) -> (B, c_out, *(spatial*factor))."""
    B = y.shape[0]
    spatial = y.shape[2:]
    nd = len(spatial)
    y = y.reshape((B, c_out) + tuple(factor) + tuple(spatial))
    perm = [0, 1]
    for k in range(nd):
        perm += [2 + nd + k, 2 + k]          # (..., spatial_k, factor_k, ...)
    y = jnp.transpose(y, perm)
    out_spatial = tuple(s * f for s, f in zip(spatial, factor))
    return y.reshape((B, c_out) + out_spatial)


@partial(jax.jit, static_argnames=("c_out", "factor"))
def upshuffle_forward(x, w, *, c_out, factor):
    """x: (B, Cin, *spatial), w: (c_out*prod(factor), Cin)."""
    B, Cin = x.shape[0], x.shape[1]
    spatial = x.shape[2:]
    S = int(np.prod(spatial))
    Cout_total = w.shape[0]

    x_flat = x.reshape(B, Cin, S)                     # free (contiguous)
    tile_s = _choose_tile_s(S, B)
    y_flat = conv1x1_flat(x_flat, w, tile_s=tile_s)   # (B, Cout_total, S)
    y = y_flat.reshape((B, Cout_total) + spatial)     # free
    return _pixel_shuffle(y, c_out, factor)


# ----------------------------------------------------------------------------
# Module wrapper mirroring the PyTorch UpShuffle interface.
# ----------------------------------------------------------------------------
class UpShufflePallas:
    def __init__(self, dim, filter_in, filter_out=None, factor=2, key=None):
        dim = int(dim)
        if isinstance(factor, int):
            factor = (factor,) * dim
        factor = tuple(int(f) for f in factor)
        assert len(factor) == dim
        if filter_out is None:
            filter_out = filter_in
        self.dim = dim
        self.filter_in = filter_in
        self.filter_out = filter_out
        self.factor = factor
        c_out_total = filter_out * int(np.prod(factor))

        if key is None:
            key = jax.random.PRNGKey(0)
        # Conv weight (out_channels, in_channels) == torch weight[:, :, 0, 0]
        bound = 1.0 / math.sqrt(filter_in)
        self.weight = jax.random.uniform(
            key, (c_out_total, filter_in), minval=-bound, maxval=bound,
            dtype=jnp.float32)

    def __call__(self, x):
        assert x.ndim == 2 + self.dim and x.shape[1] == self.filter_in
        return upshuffle_forward(x, self.weight, c_out=self.filter_out,
                                 factor=self.factor)


# ----------------------------------------------------------------------------
# Independent (numpy) reference for the dim=2 case used in the test.
# ----------------------------------------------------------------------------
def _reference_numpy_2d(x, w, c_out, factor):
    x = np.asarray(x, dtype=np.float32)
    w = np.asarray(w, dtype=np.float32)
    f0, f1 = factor
    y = np.einsum('oi,bihw->bohw', w, x)              # (B, c_out*f0*f1, H, W)
    B, _, H, W = y.shape
    out = np.zeros((B, c_out, H * f0, W * f1), dtype=np.float32)
    for i in range(f0):
        for j in range(f1):
            chans = np.arange(c_out) * (f0 * f1) + i * f1 + j
            out[:, :, i::f0, j::f1] = y[:, chans, :, :]
    return out


if __name__ == "__main__":
    key = jax.random.PRNGKey(0)
    kx, kw = jax.random.split(key)

    B, Cin, H, W = 2, 4, 16, 16
    factor = 2

    module = UpShufflePallas(dim=2, filter_in=Cin, filter_out=None,
                             factor=factor, key=kw)
    x = jax.random.normal(kx, (B, Cin, H, W), dtype=jnp.float32)

    out = module(x)
    out = jax.block_until_ready(out)
    assert out.shape == (B, Cin, H * factor, W * factor), out.shape

    ref = _reference_numpy_2d(x, module.weight, module.filter_out, module.factor)
    np.testing.assert_allclose(np.asarray(out), ref, rtol=1e-5, atol=1e-5)

    print("KERNEL_OK")
</pallas_src>

<mosaic_0001>
module attributes {stable_mosaic.version = 11 : i64} {
  func.func @_conv1x1_kernel(%arg0: i32, %arg1: i32, %arg2: memref<1x4x256xf32, #tpu.memory_space<vmem>>, %arg3: memref<16x4xf32, #tpu.memory_space<vmem>>, %arg4: memref<1x16x256xf32, #tpu.memory_space<vmem>>) attributes {dimension_semantics = [#tpu.dimension_semantics<parallel>, #tpu.dimension_semantics<parallel>], iteration_bounds = array<i64: 2, 1>, scalar_prefetch = 0 : i64, scratch_operands = 0 : i64, tpu.core_type = #tpu.core_type<tc>, window_params = [{transform_indices = @transform_0, window_bounds = array<i64: 1, 4, 256>}, {pipeline_mode = #tpu.pipeline_mode<synchronous>, transform_indices = @transform_1, window_bounds = array<i64: 16, 4>}, {transform_indices = @transform_2, window_bounds = array<i64: 1, 16, 256>}]} {
    %c0 = arith.constant 0 : index
    %c0_0 = arith.constant 0 : index
    %c0_1 = arith.constant 0 : index
    %0 = vector.load %arg2[%c0, %c0_0, %c0_1] : memref<1x4x256xf32, #tpu.memory_space<vmem>>, vector<1x4x256xf32>
    %1 = vector.shape_cast %0 : vector<1x4x256xf32> to vector<4x256xf32>
    %c0_2 = arith.constant 0 : index
    %c0_3 = arith.constant 0 : index
    %2 = vector.load %arg3[%c0_2, %c0_3] : memref<16x4xf32, #tpu.memory_space<vmem>>, vector<16x4xf32>
    %cst = arith.constant dense<0.000000e+00> : vector<16x256xf32>
    %3 = tpu.matmul %2, %1, %cst {dimension_numbers = #tpu.dot_dimension_numbers<[1], [0], [0], [1], [0, 0, 1, 1], [], []>} : vector<16x4xf32>, vector<4x256xf32>, vector<16x256xf32> -> vector<16x256xf32>
    %c0_4 = arith.constant 0 : index
    %c0_5 = arith.constant 0 : index
    %c0_6 = arith.constant 0 : index
    %4 = vector.load %arg4[%c0_4, %c0_5, %c0_6] : memref<1x16x256xf32, #tpu.memory_space<vmem>>, vector<1x16x256xf32>
    %5 = vector.shape_cast %4 : vector<1x16x256xf32> to vector<16x256xf32>
    %6 = vector.shape_cast %3 : vector<16x256xf32> to vector<1x16x256xf32>
    tpu.vector_store %arg4[%c0_4, %c0_5, %c0_6], %6 {strides = array<i32>} : memref<1x16x256xf32, #tpu.memory_space<vmem>>, vector<1x16x256xf32>,
    return
  }
  func.func @transform_0(%arg0: i32, %arg1: i32) -> (i32, i32, i32) {
    %c0_i32 = arith.constant 0 : i32
    %c0_i32_0 = arith.constant 0 : i32
    return %arg0, %c0_i32, %arg1 : i32, i32, i32
  }
  func.func @transform_1(%arg0: i32, %arg1: i32) -> (i32, i32) {
    %c0_i32 = arith.constant 0 : i32
    %c0_i32_0 = arith.constant 0 : i32
    %c0_i32_1 = arith.constant 0 : i32
    return %c0_i32, %c0_i32_0 : i32, i32
  }
  func.func @transform_2(%arg0: i32, %arg1: i32) -> (i32, i32, i32) {
    %c0_i32 = arith.constant 0 : i32
    %c0_i32_0 = arith.constant 0 : i32
    return %arg0, %c0_i32, %arg1 : i32, i32, i32
  }
}

</mosaic_0001>

<llo_original>
// kernel: upshuffle_forward.1
$region0: #{upshuffle_forward.1}
  #allocation0 [shape = 'u32[]', space=smem, size = 0x4, offset = 0x4, fixed_abs, tag = 'smem constant byte address 0x4 - core index']
  #allocation1 [shape = 'u32[144,128]{1,0:T(1,128)}', space=vmem, size = 0x12000, scoped, tag = 'internal scratch']
  %s0 = inlined_call_operand.vmem [shape: f32[2,4,256], index: 0, kind: input, shape index: {}]
  %s1 = inlined_call_operand.vmem [shape: f32[16,4], index: 1, kind: input, shape index: {}]
  %s2 = inlined_call_operand.vmem [shape: f32[2,16,256], index: 2, kind: output, shape index: {}]
  %s3 = sld [smem:[#allocation0]]
  $region41: #{upshuffle_forward.1} parent=0
    _
  %s5 = ssub.s32 1, %s3
  %s6 = scalar_select 0, %s5, %s3
  loop: start=0, step=1, limit=4
  $region2: #{upshuffle_forward.1} parent=0 // loop_pre_header
    _
  $region3: #{upshuffle_forward.1} parent=0 // loop_header
    %s8 = sphi 0, %s12
    %p9 = scmp.ge.s32.totalorder %s8, 4
    %s15 = sphi 0, %s27
    %s16 = sphi 0, %s23
    %s17 = sphi 0, %s15
    %s18 = sphi 0, %s16
    %s19 = sphi 0, %s17
    %s20 = sphi 0, %s18
    %s32 = sphi 0, %s34
    %s35 = sphi 0, %s32
    %s36 = sphi 0, %s35
    %s52 = sphi 0, %s36
    %s56 = sphi 0, %s56
    %s58 = sphi 0, %s56
    %s59 = sphi 0, %s58
    %s73 = sphi 0, %s59
    %s81 = sphi 0, %s83
    %s84 = sphi 0, %s81
    %s85 = sphi 0, %s84
    %s101 = sphi 0, %s85
  $region4: #{upshuffle_forward.1} parent=0 // loop_header_branch
    %11 = sbr.rel (%p9) target = $region8
  $region5: #{upshuffle_forward.1} parent=0 // loop_body
    %s13 = ssub.s32 %s8, 1
    %s14 = ssub.s32 %s8, 2
    %s21 = sadd.s32 1, %s16
    %p22 = scmp.ge.s32.totalorder %s21, 1
    %s23 = scalar_select %p22, 0, %s21
    %s24 = sadd.s32 1, %s15
    %s25 = scalar_select %p22, %s24, %s15
    %p26 = scmp.ge.s32.totalorder %s25, 2
    %s27 = scalar_select %p26, 0, %s25
    %s28 = ssub.s32 %s15, %s27
    %s29 = ssub.s32 %s16, %s23
    %s30 = sor.u32 %s28, %s29
    %p31 = scmp.eq.s32.totalorder %s30, 0
    %s33 = sadd.s32 %s32, 1
    %s34 = scalar_select %p31, %s32, %s33
    %p37 = pneg %p31
    %p38 = scmp.eq.s32.totalorder %s8, 1
    %p39 = por %p37, %p38
    %p40 = scmp.ne.s32.totalorder %s32, %s35
    %p41 = scmp.eq.s32.totalorder %s8, 0
    %p42 = por %p40, %p41
    %p43 = scmp.ne.s32.totalorder %s32, %s35
    %p44 = scmp.eq.s32.totalorder %s13, 1
    %p45 = por %p43, %p44
    %p46 = scmp.ne.s32.totalorder %s35, %s36
    %p47 = scmp.eq.s32.totalorder %s13, 0
    %p48 = por %p46, %p47
    %p49 = scmp.ne.s32.totalorder %s35, %s36
    %p50 = scmp.eq.s32.totalorder %s14, 1
    %p51 = por %p49, %p50
    %p53 = scmp.ne.s32.totalorder %s36, %s52
    %p54 = scmp.eq.s32.totalorder %s14, 0
    %p55 = por %p53, %p54
    %s57 = sadd.s32 %s56, 1
    %p60 = scmp.eq.s32.totalorder %s8, 1
    %p61 = scmp.ne.s32.totalorder %s56, %s58
    %p62 = scmp.eq.s32.totalorder %s8, 0
    %p63 = por %p61, %p62
    %p64 = scmp.ne.s32.totalorder %s56, %s58
    %p65 = scmp.eq.s32.totalorder %s13, 1
    %p66 = por %p64, %p65
    %p67 = scmp.ne.s32.totalorder %s58, %s59
    %p68 = scmp.eq.s32.totalorder %s13, 0
    %p69 = por %p67, %p68
    %p70 = scmp.ne.s32.totalorder %s58, %s59
    %p71 = scmp.eq.s32.totalorder %s14, 1
    %p72 = por %p70, %p71
    %p74 = scmp.ne.s32.totalorder %s59, %s73
    %p75 = scmp.eq.s32.totalorder %s14, 0
    %p76 = por %p74, %p75
    %s77 = ssub.s32 %s15, %s27
    %s78 = ssub.s32 %s16, %s23
    %s79 = sor.u32 %s77, %s78
    %p80 = scmp.eq.s32.totalorder %s79, 0
    %s82 = sadd.s32 %s81, 1
    %s83 = scalar_select %p80, %s81, %s82
    %p86 = pneg %p80
    %p87 = scmp.eq.s32.totalorder %s8, 1
    %p88 = por %p86, %p87
    %p89 = scmp.ne.s32.totalorder %s81, %s84
    %p90 = scmp.eq.s32.totalorder %s8, 0
    %p91 = por %p89, %p90
    %p92 = scmp.ne.s32.totalorder %s81, %s84
    %p93 = scmp.eq.s32.totalorder %s13, 1
    %p94 = por %p92, %p93
    %p95 = scmp.ne.s32.totalorder %s84, %s85
    %p96 = scmp.eq.s32.totalorder %s13, 0
    %p97 = por %p95, %p96
    %p98 = scmp.ne.s32.totalorder %s84, %s85
    %p99 = scmp.eq.s32.totalorder %s14, 1
    %p100 = por %p98, %p99
    %p102 = scmp.ne.s32.totalorder %s85, %s101
    %p103 = scmp.eq.s32.totalorder %s14, 0
    %p104 = por %p102, %p103
    %p105 = scmp.le.s32.totalorder 1, %s8
    %p106 = scmp.lt.s32.totalorder %s8, 3
    %p107 = pnand %p105, %p106
    %p108 = pneg %p107
    // Predicated region
    $region9: #{upshuffle_forward.1} parent=5 // pred_check
      _
    $region10: #{upshuffle_forward.1} parent=5 // pred_check_branch
      %110 = sbr.rel (%p107) target = $region12
    $region11: #{upshuffle_forward.1} parent=5 // pred_region
      %s111 = ssub.s32 %s8, 1
      // Predicated region
      $region13: #{upshuffle_forward.1} parent=11 // pred_check
        %p112 = pneg %p69
      $region14: #{upshuffle_forward.1} parent=11 // pred_check_branch
        %114 = sbr.rel (%p112) target = $region16
      $region15: #{upshuffle_forward.1} parent=11 // pred_region
        _
      $region16: #{upshuffle_forward.1} parent=11 // pred_fallthru
        _
    $region12: #{upshuffle_forward.1} parent=5 // pred_fallthru
      _
    %p115 = scmp.lt.s32.totalorder %s8, 2
    // Predicated region
    $region17: #{upshuffle_forward.1} parent=5 // pred_check
      %p116 = pneg %p115
    $region18: #{upshuffle_forward.1} parent=5 // pred_check_branch
      %118 = sbr.rel (%p116) target = $region20
    $region19: #{upshuffle_forward.1} parent=5 // pred_region
      // Predicated region
      $region21: #{upshuffle_forward.1} parent=19 // pred_check
        %p119 = pneg %p42
      $region22: #{upshuffle_forward.1} parent=19 // pred_check_branch
        %121 = sbr.rel (%p119) target = $region24
      $region23: #{upshuffle_forward.1} parent=19 // pred_region
        %s122 = smul.u32 2, %s16
        %p123 = scmp.lt.s32.totalorder %s15, 1
        %s124 = scalar_select %p123, %s15, 1
        %p125 = scmp.lt.s32.totalorder %s122, 1
        %s126 = scalar_select %p125, %s122, 1
        %s127 = smul.addr %s124, 2
        %s128 = sadd.s32 %s126, %s127
        %s129 = smul.addr %s128, 4
        %s130 = scalar_lea.vmem %s0, %s129
        %s131 = smul.u32 2, %s16
      $region24: #{upshuffle_forward.1} parent=19 // pred_fallthru
        _
    $region20: #{upshuffle_forward.1} parent=5 // pred_fallthru
      _
    %p132 = scmp.le.s32.totalorder 1, %s8
    %p133 = scmp.lt.s32.totalorder %s8, 3
    %p134 = pnand %p132, %p133
    %p135 = pneg %p134
    // Predicated region
    $region25: #{upshuffle_forward.1} parent=5 // pred_check
      _
    $region26: #{upshuffle_forward.1} parent=5 // pred_check_branch
      %137 = sbr.rel (%p134) target = $region28
    $region27: #{upshuffle_forward.1} parent=5 // pred_region
      %s138 = ssub.s32 %s8, 1
      %s139 = smul.u32 2, %s18
      %p140 = scmp.lt.s32.totalorder %s17, 1
      %s141 = scalar_select %p140, %s17, 1
      %p142 = scmp.lt.s32.totalorder %s139, 1
      %s143 = scalar_select %p142, %s139, 1
      %s144 = smul.addr %s141, 2
      %s145 = sadd.s32 %s143, %s144
      %s146 = smul.addr %s145, 4
      %s147 = scalar_lea.vmem %s0, %s146
      %p148 = pneg %p48
      %p149 = pneg %p45
      %p150 = pneg %p69
      %p151 = pneg %p66
      %p152 = pneg %p97
      %p153 = pneg %p94
      %s154 = smul.u32 2, %s18
      %p155 = scmp.lt.s32.totalorder %s17, 1
      %s156 = scalar_select %p155, %s17, 1
      %p157 = scmp.lt.s32.totalorder %s154, 1
      %s158 = scalar_select %p157, %s154, 1
      %s159 = smul.addr %s156, 4
      %s160 = sadd.s32 %s158, %s159
      %s161 = smul.addr %s160, 8
      %s162 = scalar_lea.vmem %s2, %s161
      %s163 = smul.u32 2, %s18
      %p164 = scmp.lt.s32.totalorder %s17, 1
      %s165 = scalar_select %p164, %s17, 1
      %p166 = scmp.lt.s32.totalorder %s163, 1
      %s167 = scalar_select %p166, %s163, 1
      %s168 = smul.addr %s165, 2
      %s169 = sadd.s32 %s167, %s168
      %s170 = smul.addr %s169, 4
      %s171 = scalar_lea.vmem %s0, %s170
      %s172 = smul.u32 2, %s18
      %s173 = smul.u32 2, %s18
      %p174 = scmp.lt.s32.totalorder %s17, 1
      %s175 = scalar_select %p174, %s17, 1
      %p176 = scmp.lt.s32.totalorder %s173, 1
      %s177 = scalar_select %p176, %s173, 1
      %s178 = smul.addr %s175, 4
      %s179 = sadd.s32 %s177, %s178
      %s180 = smul.addr %s179, 8
      %s181 = scalar_lea.vmem %s2, %s180
      %s182 = smul.u32 2, %s18
      %v183 = vld [vmem:[%s171] sm:$0xff]
      %v184 = vld [vmem:[%s1] sm:$0xff]
      %v185 = vld [vmem:[%s1 + $0x8] sm:$0xff]
      %v187 = vcombine.high %v183, %v183
      %vm188 = vcmask 31744
      %v190 = vsel %vm188, %v184, 0
      %v193 = vsel %vm188, %v185, 0
      %vm195 = vcmask 1043456
      %v196 = vsel %vm195, %v183, 0
      %v198 = vsel %vm195, %v187, 0
      %200 = vmatprep.subr.mxu0 %v198
      %201 = vmatpush1.msra.mxu0 %v196
      %202 = vmatprep.subr.mxu0 0.0
      %203 = vmatpush1.msra.mxu0 0.0
      %204 = vmatprep.subr.mxu0 0.0
      %205 = vmatpush1.msra.mxu0 0.0
      %206 = vmatprep.subr.mxu0 0.0
      %207 = vmatpush1.msra.mxu0 0.0
      %208 = vmatprep.subr.mxu0 0.0
      %209 = vmatpush1.msra.mxu0 0.0
      %210 = vmatprep.subr.mxu0 0.0
      %211 = vmatpush1.msra.mxu0 0.0
      %212 = vmatprep.subr.mxu0 0.0
      %213 = vmatpush1.msra.mxu0 0.0
      %214 = vmatprep.subr.mxu0 0.0
      %215 = vmatpush1.msra.mxu0 0.0
      %216 = vmatprep.subr.mxu0 0.0
      %217 = vmatpush1.msra.mxu0 0.0
      %218 = vmatprep.subr.mxu0 0.0
      %219 = vmatpush1.msra.mxu0 0.0
      %220 = vmatprep.subr.mxu0 0.0
      %221 = vmatpush1.msra.mxu0 0.0
      %222 = vmatprep.subr.mxu0 0.0
      %223 = vmatpush1.msra.mxu0 0.0
      %224 = vmatprep.subr.mxu0 0.0
      %225 = vmatpush1.msra.mxu0 0.0
      %226 = vmatprep.subr.mxu0 0.0
      %227 = vmatpush1.msra.mxu0 0.0
      %228 = vmatprep.subr.mxu0 0.0
      %229 = vmatpush1.msra.mxu0 0.0
      %230 = vmatprep.subr.mxu0 0.0
      %231 = vmatpush1.msra.mxu0 0.0
      %232 = vmatprep.subr.mxu0 0.0
      %233 = vmatpush1.msra.mxu0 0.0
      %234 = vmatprep.subr.mxu0 0.0
      %235 = vmatpush1.msra.mxu0 0.0
      %236 = vmatprep.subr.mxu0 0.0
      %237 = vmatpush1.msra.mxu0 0.0
      %238 = vmatprep.subr.mxu0 0.0
      %239 = vmatpush1.msra.mxu0 0.0
      %240 = vmatprep.subr.mxu0 0.0
      %241 = vmatpush1.msra.mxu0 0.0
      %242 = vmatprep.subr.mxu0 0.0
      %243 = vmatpush1.msra.mxu0 0.0
      %244 = vmatprep.subr.mxu0 0.0
      %245 = vmatpush1.msra.mxu0 0.0
      %246 = vmatprep.subr.mxu0 0.0
      %247 = vmatpush1.msra.mxu0 0.0
      %248 = vmatprep.subr.mxu0 0.0
      %249 = vmatpush1.msra.mxu0 0.0
      %250 = vmatprep.subr.mxu0 0.0
      %251 = vmatpush1.msra.mxu0 0.0
      %252 = vmatprep.subr.mxu0 0.0
      %253 = vmatpush1.msra.mxu0 0.0
      %254 = vmatprep.subr.mxu0 0.0
      %255 = vmatpush1.msra.mxu0 0.0
      %256 = vmatprep.subr.mxu0 0.0
      %257 = vmatpush1.msra.mxu0 0.0
      %258 = vmatprep.subr.mxu0 0.0
      %259 = vmatpush1.msra.mxu0 0.0
      %260 = vmatprep.subr.mxu0 0.0
      %261 = vmatpush1.msra.mxu0 0.0
      %262 = vmatprep.subr.mxu0 0.0
      %263 = vmatpush1.msra.mxu0 0.0
      %264 = vmatprep.mubr.f32.mxu0 0.0
      %265 = vmatmul.mubr.f32.gmra.mrb[0].mxu0 %v190
      %v266 = vpop.f32.mrb[0].mxu0
      %v267 = vadd.f32 0.0, %v266
      %v268 = vpop.f32.mrb[0].mxu0
      %v269 = vadd.f32 0.0, %v268
      %270 = vmatprep.mubr.f32.mxu0 0.0
      %271 = vmatmul.mubr.f32.gmra.mrb[0].mxu0 %v193
      %v272 = vpop.f32.mrb[0].mxu0
      %v273 = vadd.f32 0.0, %v272
      %v274 = vpop.f32.mrb[0].mxu0
      %v275 = vadd.f32 0.0, %v274
      %276 = vdwg.mxu0
      %277 = vst [vmem:[%s181] sm:$0xff] %v267
      %278 = vst [vmem:[%s181 + $0x8] sm:$0xff] %v269
      %279 = vst [vmem:[%s181 + $0x10] sm:$0xff] %v273
      %280 = vst [vmem:[%s181 + $0x18] sm:$0xff] %v275
      %s281 = smul.u32 2, %s18
      %p282 = scmp.lt.s32.totalorder %s17, 1
      %s283 = scalar_select %p282, %s17, 1
      %p284 = scmp.lt.s32.totalorder %s281, 1
      %s285 = scalar_select %p284, %s281, 1
      %s286 = smul.addr %s283, 4
      %s287 = sadd.s32 %s285, %s286
      %s288 = smul.addr %s287, 8
      %s289 = scalar_lea.vmem %s2, %s288
      // Predicated region
      $region29: #{upshuffle_forward.1} parent=27 // pred_check
        %p290 = pneg %p94
      $region30: #{upshuffle_forward.1} parent=27 // pred_check_branch
        %292 = sbr.rel (%p290) target = $region32
      $region31: #{upshuffle_forward.1} parent=27 // pred_region
        %s293 = smul.u32 2, %s18
      $region32: #{upshuffle_forward.1} parent=27 // pred_fallthru
        _
    $region28: #{upshuffle_forward.1} parent=5 // pred_fallthru
      _
    %p294 = scmp.le.s32.totalorder 2, %s8
    // Predicated region
    $region33: #{upshuffle_forward.1} parent=5 // pred_check
      %p295 = pneg %p294
    $region34: #{upshuffle_forward.1} parent=5 // pred_check_branch
      %297 = sbr.rel (%p295) target = $region36
    $region35: #{upshuffle_forward.1} parent=5 // pred_region
      %s298 = ssub.s32 %s8, 2
      // Predicated region
      $region37: #{upshuffle_forward.1} parent=35 // pred_check
        %p299 = pneg %p100
      $region38: #{upshuffle_forward.1} parent=35 // pred_check_branch
        %301 = sbr.rel (%p299) target = $region40
      $region39: #{upshuffle_forward.1} parent=35 // pred_region
        %s302 = smul.u32 2, %s20
        %p303 = scmp.lt.s32.totalorder %s19, 1
        %s304 = scalar_select %p303, %s19, 1
        %p305 = scmp.lt.s32.totalorder %s302, 1
        %s306 = scalar_select %p305, %s302, 1
        %s307 = smul.addr %s304, 4
        %s308 = sadd.s32 %s306, %s307
        %s309 = smul.addr %s308, 8
        %s310 = scalar_lea.vmem %s2, %s309
      $region40: #{upshuffle_forward.1} parent=35 // pred_fallthru
        _
    $region36: #{upshuffle_forward.1} parent=5 // pred_fallthru
      _
  $region6: #{upshuffle_forward.1} parent=0 // loop_footer
    %s12 = sadd.s32 1, %s8
  $region7: #{upshuffle_forward.1} parent=0 // loop_footer_branch
    %7 = sbr.rel target = $region3
  $region8: #{upshuffle_forward.1} parent=0 // loop_exit
    _

</llo_original>
